<compile_context>
chip_gen: v5e
topology: v5e:2x2
jax: 0.10.0
libtpu: 0.0.40
codegen_flags: <defaults>
</compile_context>

<pallas_src>
from typing import NamedTuple

import jax
import jax.numpy as jnp
from jax.experimental import pallas as pl
from jax.experimental.pallas import tpu as pltpu


def _round_up(x, m):
    return (x + m - 1) // m * m


def _choose_row_tiling(n, tm):
    """Pick a dst-row tile (multiple of 32) with an even tile count (v7x dual-TC)."""
    tm = max(32, min(tm, _round_up(n, 32)))
    n_tiles = -(-n // tm)
    if n_tiles > 1 and n_tiles % 2:
        n_tiles += 1
    tm = _round_up(-(-n // n_tiles), 32)
    n_tiles = -(-n // tm)
    return tm, n_tiles, n_tiles * tm


def _choose_k_tiling(n, tk):
    """Pick a source/K tile (multiple of 128) and matching padded extent."""
    n_k_p = _round_up(n, 128)
    tk = min(_round_up(tk, 128), n_k_p)
    n_k = -(-n_k_p // tk)
    return tk, n_k, n_k * tk


class PreparedGraph(NamedTuple):
    a_int8: jax.Array     # (R, n_rows_p, n_k_p) int8 0/1 adjacency (dst rows)
    d_dst_inv: jax.Array  # (R, n_rows_p, 1) f32, D_dst^{-1/2} (clamped degrees)
    d_src_inv: jax.Array  # (R, N) f32, D_src^{-1/2} (clamped degrees)
    n: int
    tm: int
    tk: int
    n_tiles: int
    n_k: int
    n_rows_p: int
    n_k_p: int


def prepare_graph(adj, *, tm=256, tk=512):
    """One-time (per graph) preparation: int8 adjacency + f32 degree scales.

    adj: (R, N, N) with adj[r, i, j] != 0 iff edge j -> i under relation r.
    """
    R, N, _ = adj.shape
    edges = adj != 0
    deg_dst = jnp.clip(edges.sum(axis=2).astype(jnp.float32), 1.0, None)
    deg_src = jnp.clip(edges.sum(axis=1).astype(jnp.float32), 1.0, None)

    tm, n_tiles, n_rows_p = _choose_row_tiling(N, tm)
    tk, n_k, n_k_p = _choose_k_tiling(N, tk)

    a_int8 = jnp.pad(edges.astype(jnp.int8),
                     ((0, 0), (0, n_rows_p - N), (0, n_k_p - N)))
    d_dst_inv = jnp.pad(deg_dst ** -0.5, ((0, 0), (0, n_rows_p - N)))[..., None]
    d_src_inv = deg_src ** -0.5
    return PreparedGraph(a_int8, d_dst_inv, d_src_inv, N, tm, tk,
                         n_tiles, n_k, n_rows_p, n_k_p)


def rgcn_kernel(a_ref, m_ref, ddst_ref, bsum_ref, o_ref):
    # Grid: (dst row tile i, relation r, source tile k). r and k are reductions,
    # so the f32 output block for row tile i stays resident in VMEM across both.
    r = pl.program_id(1)
    k = pl.program_id(2)

    @pl.when((r == 0) & (k == 0))
    def _():
        o_ref[...] = jnp.zeros_like(o_ref)

    # int8 0/1 adjacency tile -> bf16 via f32 (portable dequant path), then one
    # bf16 MXU matmul with f32 accumulation against the pre-scaled message slab.
    a = a_ref[...].astype(jnp.float32).astype(jnp.bfloat16)
    part = jnp.dot(a, m_ref[...], preferred_element_type=jnp.float32)

    # Per-relation destination-degree normalization (VPU row scale), then
    # accumulate into the resident output block.
    o_ref[...] += ddst_ref[...] * part

    @pl.when((r == pl.num_programs(1) - 1) & (k == pl.num_programs(2) - 1))
    def _():
        # sum_r b_r, added once per output tile.
        o_ref[...] += bsum_ref[...]


def rgcn_forward(graph: PreparedGraph, x, w, b):
    """graph: PreparedGraph, x: (N, Fin) f32, w: (R, Fin, Fout) f32, b: (R, Fout) f32."""
    R = graph.a_int8.shape[0]
    N, tm, tk = graph.n, graph.tm, graph.tk
    Fout = w.shape[2]
    fout_p = _round_up(Fout, 128)  # lane-dense output width

    # Per-relation message XW_r with the D_src^{-1/2} scaling folded in, computed
    # once per call (single batched matmul) and streamed to the kernel as bf16.
    m = jnp.einsum("nf,rfo->rno", x, w, precision=jax.lax.Precision.HIGHEST)
    m = m * graph.d_src_inv[:, :, None]
    m = jnp.pad(m, ((0, 0), (0, graph.n_k_p - N), (0, fout_p - Fout))
                ).astype(jnp.bfloat16)

    b_sum = jnp.pad(b.sum(axis=0), (0, fout_p - Fout)).astype(jnp.float32)[None, :]

    # Actual double-buffered footprint (int8 A, bf16 message, lane-padded d_dst,
    # bias, resident f32 output) plus generous headroom, capped at 32 MiB which is
    # safe on v5e/v6e (128 MiB physical) and v7x (64 MiB physical).
    vmem_bytes = (2 * tm * tk
                  + 2 * tk * fout_p * 2
                  + 2 * tm * 128 * 4
                  + 2 * 8 * fout_p * 4
                  + 2 * tm * fout_p * 4)
    vmem_limit = int(min(max(8 * vmem_bytes, 16 << 20), 32 << 20))

    cost = pl.CostEstimate(
        flops=2 * R * graph.n_rows_p * graph.n_k_p * fout_p,
        transcendentals=0,
        bytes_accessed=int(graph.a_int8.size
                           + m.size * 2
                           + graph.d_dst_inv.size * 4
                           + b_sum.size * 4
                           + graph.n_rows_p * fout_p * 4),
    )

    out = pl.pallas_call(
        rgcn_kernel,
        out_shape=jax.ShapeDtypeStruct((graph.n_rows_p, fout_p), jnp.float32),
        grid_spec=pltpu.PrefetchScalarGridSpec(
            num_scalar_prefetch=0,
            grid=(graph.n_tiles, R, graph.n_k),
            in_specs=[
                # A_r tile: tm dst rows x tk src cols, int8; relation dim squeezed.
                pl.BlockSpec((None, tm, tk), lambda i, r, k: (r, i, k)),
                # message slab: tk src rows of D_src^{-1/2} X W_r, bf16.
                pl.BlockSpec((None, tk, fout_p), lambda i, r, k: (r, k, 0)),
                # D_dst^{-1/2} column for this (relation, row tile).
                pl.BlockSpec((None, tm, 1), lambda i, r, k: (r, i, 0)),
                # sum_r b_r, resident (constant index).
                pl.BlockSpec((1, fout_p), lambda i, r, k: (0, 0)),
            ],
            out_specs=pl.BlockSpec((tm, fout_p), lambda i, r, k: (i, 0)),
        ),
        compiler_params=pltpu.CompilerParams(
            dimension_semantics=("parallel", "arbitrary", "arbitrary"),
            vmem_limit_bytes=vmem_limit,
        ),
        cost_estimate=cost,
    )(graph.a_int8, m, graph.d_dst_inv, b_sum)

    # TODO(synk): emit bf16 output directly if downstream accepts it (halves writeback).
    return out[:N, :Fout]


def rgcn_reference(adj, x, w, b):
    """Pure-JAX reference mirroring the kernel precision (exact A, bf16 messages)."""
    deg_dst = jnp.clip((adj != 0).sum(axis=2).astype(jnp.float32), 1.0, None)
    deg_src = jnp.clip((adj != 0).sum(axis=1).astype(jnp.float32), 1.0, None)
    m = jnp.einsum("nf,rfo->rno", x, w, precision=jax.lax.Precision.HIGHEST)
    m = m * (deg_src ** -0.5)[:, :, None]
    m = m.astype(jnp.bfloat16).astype(jnp.float32)
    h = jnp.einsum("rnm,rmo->rno", (adj != 0).astype(jnp.float32), m,
                   precision=jax.lax.Precision.HIGHEST)
    h = h * (deg_dst ** -0.5)[:, :, None]
    return h.sum(axis=0) + b.sum(axis=0)[None, :]


if __name__ == "__main__":
    # Small but tiling-exercising shapes: grid = (4 row tiles, 3 relations, 2 k tiles).
    num_nodes = 512
    in_feat = 64
    out_feat = 32
    num_rels = 3

    key = jax.random.PRNGKey(0)
    k_x, k_a, k_w, k_b = jax.random.split(key, 4)

    # Node features.
    x = jax.random.normal(k_x, (num_nodes, in_feat), dtype=jnp.float32)

    # Synthetic per-relation adjacency (dense 0/1), GraphConv 'both' normalization.
    adj = (jax.random.uniform(k_a, (num_rels, num_nodes, num_nodes)) < 0.05).astype(
        jnp.float32
    )

    # Per-relation GraphConv parameters (Xavier-uniform weight, small bias).
    limit = (6.0 / (in_feat + out_feat)) ** 0.5
    w = jax.random.uniform(
        k_w, (num_rels, in_feat, out_feat), minval=-limit, maxval=limit,
        dtype=jnp.float32,
    )
    b = 0.1 * jax.random.normal(k_b, (num_rels, out_feat), dtype=jnp.float32)

    # One-time graph preparation (cache this across layers / steps).
    graph = prepare_graph(adj, tm=128, tk=256)

    out = rgcn_forward(graph, x, w, b)
    out = jax.block_until_ready(out)

    ref = rgcn_reference(adj, x, w, b)
    assert out.shape == (num_nodes, out_feat)
    assert jnp.allclose(out, ref, atol=2e-3, rtol=2e-3), "mismatch vs JAX reference"

    print("KERNEL_OK")
</pallas_src>

<mosaic_0001>
module attributes {stable_mosaic.version = 11 : i64} {
  func.func @rgcn_kernel(%arg0: i32, %arg1: i32, %arg2: i32, %arg3: memref<1x128x256xi8, #tpu.memory_space<vmem>>, %arg4: memref<1x256x128xbf16, #tpu.memory_space<vmem>>, %arg5: memref<1x128x1xf32, #tpu.memory_space<vmem>>, %arg6: memref<1x128xf32, #tpu.memory_space<vmem>>, %arg7: memref<128x128xf32, #tpu.memory_space<vmem>>) attributes {dimension_semantics = [#tpu.dimension_semantics<parallel>, #tpu.dimension_semantics<arbitrary>, #tpu.dimension_semantics<arbitrary>], iteration_bounds = array<i64: 4, 3, 2>, scalar_prefetch = 0 : i64, scratch_operands = 0 : i64, tpu.core_type = #tpu.core_type<tc>, window_params = [{transform_indices = @transform_0, window_bounds = array<i64: 1, 128, 256>}, {transform_indices = @transform_1, window_bounds = array<i64: 1, 256, 128>}, {transform_indices = @transform_2, window_bounds = array<i64: 1, 128, 1>}, {pipeline_mode = #tpu.pipeline_mode<synchronous>, transform_indices = @transform_3, window_bounds = array<i64: 1, 128>}, {transform_indices = @transform_4, window_bounds = array<i64: 128, 128>}]} {
    %c0_i32 = arith.constant 0 : i32
    %0 = arith.cmpi eq, %arg1, %c0_i32 : i32
    %c0_i32_0 = arith.constant 0 : i32
    %1 = arith.cmpi eq, %arg2, %c0_i32_0 : i32
    %2 = arith.andi %0, %1 : i1
    %3 = arith.extui %2 : i1 to i32
    %c0_i32_1 = arith.constant 0 : i32
    %4 = arith.cmpi ne, %3, %c0_i32_1 : i32
    scf.if %4 {
      %cst_15 = arith.constant 0.000000e+00 : f32
      %24 = vector.broadcast %cst_15 : f32 to vector<128x128xf32>
      %c0_16 = arith.constant 0 : index
      %c0_17 = arith.constant 0 : index
      %25 = vector.load %arg7[%c0_16, %c0_17] : memref<128x128xf32, #tpu.memory_space<vmem>>, vector<128x128xf32>
      tpu.vector_store %arg7[%c0_16, %c0_17], %24 {strides = array<i32>} : memref<128x128xf32, #tpu.memory_space<vmem>>, vector<128x128xf32>,
    } else {
    }
    %c0 = arith.constant 0 : index
    %c0_2 = arith.constant 0 : index
    %c0_3 = arith.constant 0 : index
    %5 = vector.load %arg3[%c0, %c0_2, %c0_3] : memref<1x128x256xi8, #tpu.memory_space<vmem>>, vector<1x128x256xi8>
    %6 = vector.shape_cast %5 : vector<1x128x256xi8> to vector<128x256xi8>
    %7 = arith.sitofp %6 : vector<128x256xi8> to vector<128x256xf32>
    %8 = arith.truncf %7 : vector<128x256xf32> to vector<128x256xbf16>
    %c0_4 = arith.constant 0 : index
    %c0_5 = arith.constant 0 : index
    %c0_6 = arith.constant 0 : index
    %9 = vector.load %arg4[%c0_4, %c0_5, %c0_6] : memref<1x256x128xbf16, #tpu.memory_space<vmem>>, vector<1x256x128xbf16>
    %10 = vector.shape_cast %9 : vector<1x256x128xbf16> to vector<256x128xbf16>
    %cst = arith.constant dense<0.000000e+00> : vector<128x128xf32>
    %11 = tpu.matmul %8, %10, %cst {dimension_numbers = #tpu.dot_dimension_numbers<[1], [0], [0], [1], [0, 0, 1, 1], [], []>} : vector<128x256xbf16>, vector<256x128xbf16>, vector<128x128xf32> -> vector<128x128xf32>
    %c0_7 = arith.constant 0 : index
    %c0_8 = arith.constant 0 : index
    %12 = vector.load %arg7[%c0_7, %c0_8] : memref<128x128xf32, #tpu.memory_space<vmem>>, vector<128x128xf32>
    %c0_9 = arith.constant 0 : index
    %c0_10 = arith.constant 0 : index
    %c0_11 = arith.constant 0 : index
    %13 = vector.load %arg5[%c0_9, %c0_10, %c0_11] : memref<1x128x1xf32, #tpu.memory_space<vmem>>, vector<1x128x1xf32>
    %14 = vector.shape_cast %13 : vector<1x128x1xf32> to vector<128x1xf32>
    %15 = vector.broadcast %14 : vector<128x1xf32> to vector<128x128xf32>
    %16 = arith.mulf %15, %11 : vector<128x128xf32>
    %17 = arith.addf %12, %16 : vector<128x128xf32>
    %c0_12 = arith.constant 0 : index
    %c0_13 = arith.constant 0 : index
    %18 = vector.load %arg7[%c0_12, %c0_13] : memref<128x128xf32, #tpu.memory_space<vmem>>, vector<128x128xf32>
    tpu.vector_store %arg7[%c0_12, %c0_13], %17 {strides = array<i32>} : memref<128x128xf32, #tpu.memory_space<vmem>>, vector<128x128xf32>,
    %c2_i32 = arith.constant 2 : i32
    %19 = arith.cmpi eq, %arg1, %c2_i32 : i32
    %c1_i32 = arith.constant 1 : i32
    %20 = arith.cmpi eq, %arg2, %c1_i32 : i32
    %21 = arith.andi %19, %20 : i1
    %22 = arith.extui %21 : i1 to i32
    %c0_i32_14 = arith.constant 0 : i32
    %23 = arith.cmpi ne, %22, %c0_i32_14 : i32
    scf.if %23 {
      %c0_15 = arith.constant 0 : index
      %c0_16 = arith.constant 0 : index
      %24 = vector.load %arg7[%c0_15, %c0_16] : memref<128x128xf32, #tpu.memory_space<vmem>>, vector<128x128xf32>
      %c0_17 = arith.constant 0 : index
      %c0_18 = arith.constant 0 : index
      %25 = vector.load %arg6[%c0_17, %c0_18] : memref<1x128xf32, #tpu.memory_space<vmem>>, vector<1x128xf32>
      %26 = vector.broadcast %25 : vector<1x128xf32> to vector<128x128xf32>
      %27 = arith.addf %24, %26 : vector<128x128xf32>
      %c0_19 = arith.constant 0 : index
      %c0_20 = arith.constant 0 : index
      %28 = vector.load %arg7[%c0_19, %c0_20] : memref<128x128xf32, #tpu.memory_space<vmem>>, vector<128x128xf32>
      tpu.vector_store %arg7[%c0_19, %c0_20], %27 {strides = array<i32>} : memref<128x128xf32, #tpu.memory_space<vmem>>, vector<128x128xf32>,
    } else {
    }
    return
  }
  func.func @transform_0(%arg0: i32, %arg1: i32, %arg2: i32) -> (i32, i32, i32) {
    %c0_i32 = arith.constant 0 : i32
    return %arg1, %arg0, %arg2 : i32, i32, i32
  }
  func.func @transform_1(%arg0: i32, %arg1: i32, %arg2: i32) -> (i32, i32, i32) {
    %c0_i32 = arith.constant 0 : i32
    %c0_i32_0 = arith.constant 0 : i32
    return %arg1, %arg2, %c0_i32 : i32, i32, i32
  }
  func.func @transform_2(%arg0: i32, %arg1: i32, %arg2: i32) -> (i32, i32, i32) {
    %c0_i32 = arith.constant 0 : i32
    %c0_i32_0 = arith.constant 0 : i32
    return %arg1, %arg0, %c0_i32 : i32, i32, i32
  }
  func.func @transform_3(%arg0: i32, %arg1: i32, %arg2: i32) -> (i32, i32) {
    %c0_i32 = arith.constant 0 : i32
    %c0_i32_0 = arith.constant 0 : i32
    %c0_i32_1 = arith.constant 0 : i32
    return %c0_i32, %c0_i32_0 : i32, i32
  }
  func.func @transform_4(%arg0: i32, %arg1: i32, %arg2: i32) -> (i32, i32) {
    %c0_i32 = arith.constant 0 : i32
    %c0_i32_0 = arith.constant 0 : i32
    return %arg0, %c0_i32 : i32, i32
  }
}

</mosaic_0001>

<llo_original>
// kernel: tpu_custom_call.1
$region0: #{tpu_custom_call.1}
  #allocation0 [shape = 'u32[]', space=smem, size = 0x4, offset = 0x4, fixed_abs, tag = 'smem constant byte address 0x4 - core index']
  #allocation1 [shape = 'u32[72,128]{1,0:T(1,128)}', space=vmem, size = 0x9000, scoped, tag = 'internal scratch']
  %s0 = inlined_call_operand.vmem [shape: s8[3,512,512], index: 0, kind: input, shape index: {}]
  %s1 = inlined_call_operand.hbm [shape: bf16[3,512,128], index: 1, kind: input, shape index: {}]
  %s2 = inlined_call_operand.vmem [shape: f32[3,512,1], index: 2, kind: input, shape index: {}]
  %s3 = inlined_call_operand.vmem [shape: f32[1,128], index: 3, kind: input, shape index: {}]
  %s4 = inlined_call_operand.hbm [shape: f32[512,128], index: 4, kind: output, shape index: {}]
  %s5 = sld [smem:[#allocation0]]
  $region84: #{tpu_custom_call.1} parent=0
    _
  %s7 = ssub.s32 1, %s5
  %s8 = scalar_select 0, %s7, %s5
  $region1: #{tpu_custom_call.1} parent=0
    #allocation2 [shape = 'u8[65536]{0}', space=vmem, size = 0x10000, scoped, tag = 'input window, operand 0']
    #allocation3 [shape = 'u8[131072]{0}', space=vmem, size = 0x20000, scoped, tag = 'input window, operand 1']
    #allocation4 [shape = 's32[2]{0}', space=sflag, size = 0x8, scoped, tag = 'scoped memory for tpu_custom_call.1']
    #allocation5 [shape = 's32[2]{0}', space=sflag, size = 0x8, scoped, tag = 'scoped memory for tpu_custom_call.1']
    #allocation6 [shape = 'u8[131072]{0}', space=vmem, size = 0x20000, scoped, tag = 'output window, operand 0']
    %9 = vsyncpa [#allocation4], 0
    %s10 = scalar_lea.sflag [#allocation4], 1
    %11 = vsyncpa %s10, 0
    %12 = vsyncpa [#allocation5], 0
    %s13 = scalar_lea.sflag [#allocation5], 1
    %14 = vsyncpa %s13, 0
    loop: start=0, step=1, limit=26
    $region2: #{tpu_custom_call.1} parent=1 // loop_pre_header
      _
    $region3: #{tpu_custom_call.1} parent=1 // loop_header
      %s16 = sphi 0, %s20
      %p17 = scmp.ge.s32.totalorder %s16, 26
      %s23 = sphi 0, %s42
      %s24 = sphi 0, %s38
      %s25 = sphi 0, %s34
      %s26 = sphi 0, %s23
      %s27 = sphi 0, %s24
      %s28 = sphi 0, %s25
      %s29 = sphi 0, %s26
      %s30 = sphi 0, %s27
      %s31 = sphi 0, %s28
      %s49 = sphi 0, %s51
      %s52 = sphi 0, %s49
      %s53 = sphi 0, %s52
      %s69 = sphi 0, %s53
      %s77 = sphi 0, %s79
      %s80 = sphi 0, %s77
      %s81 = sphi 0, %s80
      %s97 = sphi 0, %s81
      %s105 = sphi 0, %s107
      %s108 = sphi 0, %s105
      %s109 = sphi 0, %s108
      %s125 = sphi 0, %s109
      %s129 = sphi 0, %s129
      %s131 = sphi 0, %s129
      %s132 = sphi 0, %s131
      %s146 = sphi 0, %s132
      %s152 = sphi 0, %s154
      %s155 = sphi 0, %s152
      %s156 = sphi 0, %s155
      %s172 = sphi 0, %s156
    $region4: #{tpu_custom_call.1} parent=1 // loop_header_branch
      %19 = sbr.rel (%p17) target = $region8
    $region5: #{tpu_custom_call.1} parent=1 // loop_body
      %s21 = ssub.s32 %s16, 1
      %s22 = ssub.s32 %s16, 2
      %s32 = sadd.s32 1, %s25
      %p33 = scmp.ge.s32.totalorder %s32, 2
      %s34 = scalar_select %p33, 0, %s32
      %s35 = sadd.s32 1, %s24
      %s36 = scalar_select %p33, %s35, %s24
      %p37 = scmp.ge.s32.totalorder %s36, 3
      %s38 = scalar_select %p37, 0, %s36
      %s39 = sadd.s32 1, %s23
      %s40 = scalar_select %p37, %s39, %s23
      %p41 = scmp.ge.s32.totalorder %s40, 4
      %s42 = scalar_select %p41, 0, %s40
      %s43 = ssub.s32 %s24, %s38
      %s44 = ssub.s32 %s23, %s42
      %s45 = sor.u32 %s43, %s44
      %s46 = ssub.s32 %s25, %s34
      %s47 = sor.u32 %s45, %s46
      %p48 = scmp.eq.s32.totalorder %s47, 0
      %s50 = sadd.s32 %s49, 1
      %s51 = scalar_select %p48, %s49, %s50
      %p54 = pneg %p48
      %p55 = scmp.eq.s32.totalorder %s16, 23
      %p56 = por %p54, %p55
      %p57 = scmp.ne.s32.totalorder %s49, %s52
      %p58 = scmp.eq.s32.totalorder %s16, 0
      %p59 = por %p57, %p58
      %p60 = scmp.ne.s32.totalorder %s49, %s52
      %p61 = scmp.eq.s32.totalorder %s21, 23
      %p62 = por %p60, %p61
      %p63 = scmp.ne.s32.totalorder %s52, %s53
      %p64 = scmp.eq.s32.totalorder %s21, 0
      %p65 = por %p63, %p64
      %p66 = scmp.ne.s32.totalorder %s52, %s53
      %p67 = scmp.eq.s32.totalorder %s22, 23
      %p68 = por %p66, %p67
      %p70 = scmp.ne.s32.totalorder %s53, %s69
      %p71 = scmp.eq.s32.totalorder %s22, 0
      %p72 = por %p70, %p71
      %s73 = ssub.s32 %s24, %s38
      %s74 = ssub.s32 %s25, %s34
      %s75 = sor.u32 %s73, %s74
      %p76 = scmp.eq.s32.totalorder %s75, 0
      %s78 = sadd.s32 %s77, 1
      %s79 = scalar_select %p76, %s77, %s78
      %p82 = pneg %p76
      %p83 = scmp.eq.s32.totalorder %s16, 23
      %p84 = por %p82, %p83
      %p85 = scmp.ne.s32.totalorder %s77, %s80
      %p86 = scmp.eq.s32.totalorder %s16, 0
      %p87 = por %p85, %p86
      %p88 = scmp.ne.s32.totalorder %s77, %s80
      %p89 = scmp.eq.s32.totalorder %s21, 23
      %p90 = por %p88, %p89
      %p91 = scmp.ne.s32.totalorder %s80, %s81
      %p92 = scmp.eq.s32.totalorder %s21, 0
      %p93 = por %p91, %p92
      %p94 = scmp.ne.s32.totalorder %s80, %s81
      %p95 = scmp.eq.s32.totalorder %s22, 23
      %p96 = por %p94, %p95
      %p98 = scmp.ne.s32.totalorder %s81, %s97
      %p99 = scmp.eq.s32.totalorder %s22, 0
      %p100 = por %p98, %p99
      %s101 = ssub.s32 %s24, %s38
      %s102 = ssub.s32 %s23, %s42
      %s103 = sor.u32 %s101, %s102
      %p104 = scmp.eq.s32.totalorder %s103, 0
      %s106 = sadd.s32 %s105, 1
      %s107 = scalar_select %p104, %s105, %s106
      %p110 = pneg %p104
      %p111 = scmp.eq.s32.totalorder %s16, 23
      %p112 = por %p110, %p111
      %p113 = scmp.ne.s32.totalorder %s105, %s108
      %p114 = scmp.eq.s32.totalorder %s16, 0
      %p115 = por %p113, %p114
      %p116 = scmp.ne.s32.totalorder %s105, %s108
      %p117 = scmp.eq.s32.totalorder %s21, 23
      %p118 = por %p116, %p117
      %p119 = scmp.ne.s32.totalorder %s108, %s109
      %p120 = scmp.eq.s32.totalorder %s21, 0
      %p121 = por %p119, %p120
      %p122 = scmp.ne.s32.totalorder %s108, %s109
      %p123 = scmp.eq.s32.totalorder %s22, 23
      %p124 = por %p122, %p123
      %p126 = scmp.ne.s32.totalorder %s109, %s125
      %p127 = scmp.eq.s32.totalorder %s22, 0
      %p128 = por %p126, %p127
      %s130 = sadd.s32 %s129, 1
      %p133 = scmp.eq.s32.totalorder %s16, 23
      %p134 = scmp.ne.s32.totalorder %s129, %s131
      %p135 = scmp.eq.s32.totalorder %s16, 0
      %p136 = por %p134, %p135
      %p137 = scmp.ne.s32.totalorder %s129, %s131
      %p138 = scmp.eq.s32.totalorder %s21, 23
      %p139 = por %p137, %p138
      %p140 = scmp.ne.s32.totalorder %s131, %s132
      %p141 = scmp.eq.s32.totalorder %s21, 0
      %p142 = por %p140, %p141
      %p143 = scmp.ne.s32.totalorder %s131, %s132
      %p144 = scmp.eq.s32.totalorder %s22, 23
      %p145 = por %p143, %p144
      %p147 = scmp.ne.s32.totalorder %s132, %s146
      %p148 = scmp.eq.s32.totalorder %s22, 0
      %p149 = por %p147, %p148
      %s150 = ssub.s32 %s23, %s42
      %p151 = scmp.eq.s32.totalorder %s150, 0
      %s153 = sadd.s32 %s152, 1
      %s154 = scalar_select %p151, %s152, %s153
      %p157 = pneg %p151
      %p158 = scmp.eq.s32.totalorder %s16, 23
      %p159 = por %p157, %p158
      %p160 = scmp.ne.s32.totalorder %s152, %s155
      %p161 = scmp.eq.s32.totalorder %s16, 0
      %p162 = por %p160, %p161
      %p163 = scmp.ne.s32.totalorder %s152, %s155
      %p164 = scmp.eq.s32.totalorder %s21, 23
      %p165 = por %p163, %p164
      %p166 = scmp.ne.s32.totalorder %s155, %s156
      %p167 = scmp.eq.s32.totalorder %s21, 0
      %p168 = por %p166, %p167
      %p169 = scmp.ne.s32.totalorder %s155, %s156
      %p170 = scmp.eq.s32.totalorder %s22, 23
      %p171 = por %p169, %p170
      %p173 = scmp.ne.s32.totalorder %s156, %s172
      %p174 = scmp.eq.s32.totalorder %s22, 0
      %p175 = por %p173, %p174
      %p176 = scmp.le.s32.totalorder 1, %s16
      %p177 = scmp.lt.s32.totalorder %s16, 25
      %p178 = pnand %p176, %p177
      %p179 = pneg %p178
      // Predicated region
      $region9: #{tpu_custom_call.1} parent=5 // pred_check
        _
      $region10: #{tpu_custom_call.1} parent=5 // pred_check_branch
        %181 = sbr.rel (%p178) target = $region12
      $region11: #{tpu_custom_call.1} parent=5 // pred_region
        %s182 = ssub.s32 %s16, 1
        // Predicated region
        $region13: #{tpu_custom_call.1} parent=11 // pred_check
          %p183 = pneg %p142
        $region14: #{tpu_custom_call.1} parent=11 // pred_check_branch
          %185 = sbr.rel (%p183) target = $region16
        $region15: #{tpu_custom_call.1} parent=11 // pred_region
          _
        $region16: #{tpu_custom_call.1} parent=11 // pred_fallthru
          _
      $region12: #{tpu_custom_call.1} parent=5 // pred_fallthru
        _
      %p186 = scmp.lt.s32.totalorder %s16, 24
      // Predicated region
      $region17: #{tpu_custom_call.1} parent=5 // pred_check
        %p187 = pneg %p186
      $region18: #{tpu_custom_call.1} parent=5 // pred_check_branch
        %189 = sbr.rel (%p187) target = $region20
      $region19: #{tpu_custom_call.1} parent=5 // pred_region
        // Predicated region
        $region21: #{tpu_custom_call.1} parent=19 // pred_check
          %p190 = pneg %p59
        $region22: #{tpu_custom_call.1} parent=19 // pred_check_branch
          %192 = sbr.rel (%p190) target = $region24
        $region23: #{tpu_custom_call.1} parent=19 // pred_region
          %s193 = sand.u32 %s49, 1
          %s194 = sand.u32 %s49, 1
          %s195 = smul.addr %s194, 64
          %s196 = scalar_lea.vmem [#allocation2], %s195
          %s197 = smul.u32 4, %s23
          %s198 = smul.u32 2, %s25
          %s199 = smul.addr %s197, 4
          %s200 = sadd.s32 %s198, %s199
          %s201 = smul.addr %s24, 64
          %s202 = sadd.s32 %s200, %s201
          %s203 = smul.addr %s202, 8
          %s204 = scalar_lea.vmem %s0, %s203
          // Predicated region
          $region25: #{tpu_custom_call.1} parent=23 // pred_check
            _
          $region26: #{tpu_custom_call.1} parent=23 // pred_check_branch
            %206 = sbr.rel (0) target = $region28
          $region27: #{tpu_custom_call.1} parent=23 // pred_region
            // Predicated region
            $region29: #{tpu_custom_call.1} parent=27 // pred_check
              _
            $region30: #{tpu_custom_call.1} parent=27 // pred_check_branch
              %208 = sbr.rel (0) target = $region32
            $region31: #{tpu_custom_call.1} parent=27 // pred_region
              loop: start=0, step=1, limit=1
              $region33: #{tpu_custom_call.1} parent=31 // loop_pre_header
                _
              $region34: #{tpu_custom_call.1} parent=31 // loop_header
                %s210 = sphi 0, %s214
                %p211 = scmp.ge.s32.totalorder %s210, 1
                %s215 = sphi %s204, %s204
                %s216 = sphi %s196, %s196
              $region35: #{tpu_custom_call.1} parent=31 // loop_header_branch
                %213 = sbr.rel (%p211) target = $region39
              $region36: #{tpu_custom_call.1} parent=31 // loop_body
                %v217 = vld [vmem:[%s215] sm:$0xff]
                %218 = vst [vmem:[%s216] sm:$0xff] %v217
                %v219 = vld [vmem:[%s215 + $0x8] sm:$0xff]
                %220 = vst [vmem:[%s216 + $0x8] sm:$0xff] %v219
                %v221 = vld [vmem:[%s215 + $0x20] sm:$0xff]
                %222 = vst [vmem:[%s216 + $0x10] sm:$0xff] %v221
                %v223 = vld [vmem:[%s215 + $0x28] sm:$0xff]
                %224 = vst [vmem:[%s216 + $0x18] sm:$0xff] %v223
                %v225 = vld [vmem:[%s215 + $0x40] sm:$0xff]
                %226 = vst [vmem:[%s216 + $0x20] sm:$0xff] %v225
                %v227 = vld [vmem:[%s215 + $0x48] sm:$0xff]
                %228 = vst [vmem:[%s216 + $0x28] sm:$0xff] %v227
                %v229 = vld [vmem:[%s215 + $0x60] sm:$0xff]
                %230 = vst [vmem:[%s216 + $0x30] sm:$0xff] %v229
                %v231 = vld [vmem:[%s215 + $0x68] sm:$0xff]
                %232 = vst [vmem:[%s216 + $0x38] sm:$0xff] %v231
              $region37: #{tpu_custom_call.1} parent=31 // loop_footer
                %s214 = sadd.s32 1, %s210
              $region38: #{tpu_custom_call.1} parent=31 // loop_footer_branch
                %209 = sbr.rel target = $region34
              $region39: #{tpu_custom_call.1} parent=31 // loop_exit
                _
            $region32: #{tpu_custom_call.1} parent=27 // pred_fallthru
              _
            // Predicated region
            $region40: #{tpu_custom_call.1} parent=27 // pred_check
              _
            $region41: #{tpu_custom_call.1} parent=27 // pred_check_branch
              %234 = sbr.rel target = $region43
            $region42: #{tpu_custom_call.1} parent=27 // pred_region
              _
            $region43: #{tpu_custom_call.1} parent=27 // pred_fallthru
              _
          $region28: #{tpu_custom_call.1} parent=23 // pred_fallthru
            _
          %235 = vnop
        $region24: #{tpu_custom_call.1} parent=19 // pred_fallthru
          _
        // Predicated region
        $region44: #{tpu_custom_call.1} parent=19 // pred_check
          %p236 = pneg %p87
        $region45: #{tpu_custom_call.1} parent=19 // pred_check_branch
          %238 = sbr.rel (%p236) target = $region47
        $region46: #{tpu_custom_call.1} parent=19 // pred_region
          %s239 = sand.u32 %s77, 1
          %s240 = scalar_lea.sflag [#allocation4], %s239
          %s241 = sand.u32 %s77, 1
          %s242 = smul.addr %s241, 128
          %s243 = scalar_lea.vmem [#allocation3], %s242
          %s244 = smul.u32 32, %s25
          %246 = vsyncadd %s240, 0
          %s247 = smul.addr %s24, 64
          %s248 = sadd.s32 %s244, %s247
          %s249 = smul.addr %s248, 4
          %s250 = scalar_lea.hbm %s1, %s249
          %s251 = sshll.u32 %s250, 4
          %s252 = int_to_ptr.hbm [resolvable:$true] %s251
          %s253 = sshll.u32 %s243, 4
          %s254 = int_to_ptr.vmem [resolvable:$true] %s253
          %259 = dma.hbm_to_vmem [thread:$0]  %s252, 2048, %s254, %s240, 64, 64, 4
        $region47: #{tpu_custom_call.1} parent=19 // pred_fallthru
          _
        // Predicated region
        $region48: #{tpu_custom_call.1} parent=19 // pred_check
          %p260 = pneg %p115
        $region49: #{tpu_custom_call.1} parent=19 // pred_check_branch
          %262 = sbr.rel (%p260) target = $region51
        $region50: #{tpu_custom_call.1} parent=19 // pred_region
          %s263 = smul.u32 16, %s23
          %p264 = scmp.lt.s32.totalorder %s24, 2
          %s265 = scalar_select %p264, %s24, 2
          %p266 = scmp.lt.s32.totalorder %s263, 63
          %s267 = scalar_select %p266, %s263, 63
          %s268 = smul.addr %s265, 64
          %s269 = sadd.s32 %s267, %s268
          %s270 = smul.addr %s269, 8
          %s271 = scalar_lea.vmem %s2, %s270
          %s272 = smul.u32 16, %s23
        $region51: #{tpu_custom_call.1} parent=19 // pred_fallthru
          _
      $region20: #{tpu_custom_call.1} parent=5 // pred_fallthru
        _
      %p273 = scmp.le.s32.totalorder 1, %s16
      %p274 = scmp.lt.s32.totalorder %s16, 25
      %p275 = pnand %p273, %p274
      %p276 = pneg %p275
      // Predicated region
      $region52: #{tpu_custom_call.1} parent=5 // pred_check
        _
      $region53: #{tpu_custom_call.1} parent=5 // pred_check_branch
        %278 = sbr.rel (%p275) target = $region55
      $region54: #{tpu_custom_call.1} parent=5 // pred_region
        %s279 = ssub.s32 %s16, 1
        %s280 = sand.u32 %s52, 1
        %s281 = sand.u32 %s52, 1
        %s282 = smul.addr %s281, 64
        %s283 = scalar_lea.vmem [#allocation2], %s282
        // Predicated region
        $region56: #{tpu_custom_call.1} parent=54 // pred_check
          %p284 = pneg %p65
        $region57: #{tpu_custom_call.1} parent=54 // pred_check_branch
          %286 = sbr.rel (%p284) target = $region59
        $region58: #{tpu_custom_call.1} parent=54 // pred_region
          _
        $region59: #{tpu_custom_call.1} parent=54 // pred_fallthru
          _
        %s287 = sand.u32 %s80, 1
        %s288 = scalar_lea.sflag [#allocation4], %s287
        %s289 = sand.u32 %s80, 1
        %s290 = smul.addr %s289, 128
        %s291 = scalar_lea.vmem [#allocation3], %s290
        // Predicated region
        $region60: #{tpu_custom_call.1} parent=54 // pred_check
          %p292 = pneg %p93
        $region61: #{tpu_custom_call.1} parent=54 // pred_check_branch
          %294 = sbr.rel (%p292) target = $region63
        $region62: #{tpu_custom_call.1} parent=54 // pred_region
          %296 = dma.done %s288, 2048
        $region63: #{tpu_custom_call.1} parent=54 // pred_fallthru
          _
        %s297 = sand.u32 %s52, 1
        %s298 = sand.u32 %s52, 1
        %s299 = smul.addr %s298, 64
        %s300 = scalar_lea.vmem [#allocation2], %s299
        %p301 = pneg %p65
        %p302 = pneg %p62
        %s303 = sand.u32 %s80, 1
        %s304 = scalar_lea.sflag [#allocation4], %s303
        %s305 = sand.u32 %s80, 1
        %s306 = smul.addr %s305, 128
        %s307 = scalar_lea.vmem [#allocation3], %s306
        %p308 = pneg %p93
        %p309 = pneg %p90
        %s310 = smul.u32 16, %s26
        %p311 = scmp.lt.s32.totalorder %s27, 2
        %s312 = scalar_select %p311, %s27, 2
        %p313 = scmp.lt.s32.totalorder %s310, 63
        %s314 = scalar_select %p313, %s310, 63
        %s315 = smul.addr %s312, 64
        %s316 = sadd.s32 %s314, %s315
        %s317 = smul.addr %s316, 8
        %s318 = scalar_lea.vmem %s2, %s317
        %p319 = pneg %p121
        %p320 = pneg %p118
        %p321 = pneg %p142
        %p322 = pneg %p139
        %p323 = pneg %p168
        %p324 = pneg %p165
        %s325 = sand.u32 %s155, 1
        %s326 = scalar_lea.sflag [#allocation5], %s325
        %s327 = sand.u32 %s155, 1
        %s328 = smul.addr %s327, 128
        %s329 = scalar_lea.vmem [#allocation6], %s328
        %s330 = smul.u32 4, %s26
        %s331 = smul.u32 2, %s28
        %s332 = smul.u32 32, %s28
        %s333 = smul.u32 16, %s26
        %p334 = scmp.lt.s32.totalorder %s27, 2
        %s335 = scalar_select %p334, %s27, 2
        %p336 = scmp.lt.s32.totalorder %s333, 63
        %s337 = scalar_select %p336, %s333, 63
        %s338 = smul.addr %s335, 64
        %s339 = sadd.s32 %s337, %s338
        %s340 = smul.addr %s339, 8
        %s341 = scalar_lea.vmem %s2, %s340
        %s342 = smul.u32 16, %s26
        %s343 = smul.u32 16, %s26
        %p344 = scmp.eq.s32.totalorder %s27, 0
        %p345 = scmp.eq.s32.totalorder %s28, 0
        %p346 = pnand %p344, %p345
        %p347 = pneg %p346
        // Predicated region
        $region64: #{tpu_custom_call.1} parent=54 // pred_check
          _
        $region65: #{tpu_custom_call.1} parent=54 // pred_check_branch
          %349 = sbr.rel (%p346) target = $region67
        $region66: #{tpu_custom_call.1} parent=54 // pred_region
          %350 = vst [vmem:[%s329] sm:$0xff] 0.0
          %351 = vst [vmem:[%s329 + $0x8] sm:$0xff] 0.0
          %352 = vst [vmem:[%s329 + $0x10] sm:$0xff] 0.0
          %353 = vst [vmem:[%s329 + $0x18] sm:$0xff] 0.0
          %354 = vst [vmem:[%s329 + $0x20] sm:$0xff] 0.0
          %355 = vst [vmem:[%s329 + $0x28] sm:$0xff] 0.0
          %356 = vst [vmem:[%s329 + $0x30] sm:$0xff] 0.0
          %357 = vst [vmem:[%s329 + $0x38] sm:$0xff] 0.0
          %358 = vst [vmem:[%s329 + $0x40] sm:$0xff] 0.0
          %359 = vst [vmem:[%s329 + $0x48] sm:$0xff] 0.0
          %360 = vst [vmem:[%s329 + $0x50] sm:$0xff] 0.0
          %361 = vst [vmem:[%s329 + $0x58] sm:$0xff] 0.0
          %362 = vst [vmem:[%s329 + $0x60] sm:$0xff] 0.0
          %363 = vst [vmem:[%s329 + $0x68] sm:$0xff] 0.0
          %364 = vst [vmem:[%s329 + $0x70] sm:$0xff] 0.0
          %365 = vst [vmem:[%s329 + $0x78] sm:$0xff] 0.0
        $region67: #{tpu_custom_call.1} parent=54 // pred_fallthru
          _
        %v366 = vld [vmem:[%s283] sm:$0xff]
        %v367 = vld [vmem:[%s283 + $0x8] sm:$0xff]
        %v368 = vld [vmem:[%s283 + $0x10] sm:$0xff]
        %v369 = vld [vmem:[%s283 + $0x18] sm:$0xff]
        %v370 = vld [vmem:[%s283 + $0x20] sm:$0xff]
        %v371 = vld [vmem:[%s283 + $0x28] sm:$0xff]
        %v372 = vld [vmem:[%s283 + $0x30] sm:$0xff]
        %v373 = vld [vmem:[%s283 + $0x38] sm:$0xff]
        %v374 = vunpack.c.0.s8 %v366
        %v375 = vunpack.c.0.s8 %v367
        %v376 = vunpack.c.1.s8 %v366
        %v377 = vunpack.c.1.s8 %v367
        %v378 = vunpack.c.2.s8 %v366
        %v379 = vunpack.c.2.s8 %v367
        %v380 = vunpack.c.3.s8 %v366
        %v381 = vunpack.c.3.s8 %v367
        %v382 = vunpack.c.0.s8 %v368
        %v383 = vunpack.c.0.s8 %v369
        %v384 = vunpack.c.1.s8 %v368
        %v385 = vunpack.c.1.s8 %v369
        %v386 = vunpack.c.2.s8 %v368
        %v387 = vunpack.c.2.s8 %v369
        %v388 = vunpack.c.3.s8 %v368
        %v389 = vunpack.c.3.s8 %v369
        %v390 = vunpack.c.0.s8 %v370
        %v391 = vunpack.c.0.s8 %v371
        %v392 = vunpack.c.1.s8 %v370
        %v393 = vunpack.c.1.s8 %v371
        %v394 = vunpack.c.2.s8 %v370
        %v395 = vunpack.c.2.s8 %v371
        %v396 = vunpack.c.3.s8 %v370
        %v397 = vunpack.c.3.s8 %v371
        %v398 = vunpack.c.0.s8 %v372
        %v399 = vunpack.c.0.s8 %v373
        %v400 = vunpack.c.1.s8 %v372
        %v401 = vunpack.c.1.s8 %v373
        %v402 = vunpack.c.2.s8 %v372
        %v403 = vunpack.c.2.s8 %v373
        %v404 = vunpack.c.3.s8 %v372
        %v405 = vunpack.c.3.s8 %v373
        %v406 = vcvt.s32.f32 %v374
        %v407 = vcvt.s32.f32 %v375
        %v408 = vcvt.s32.f32 %v376
        %v409 = vcvt.s32.f32 %v377
        %v410 = vcvt.s32.f32 %v378
        %v411 = vcvt.s32.f32 %v379
        %v412 = vcvt.s32.f32 %v380
        %v413 = vcvt.s32.f32 %v381
        %v414 = vcvt.s32.f32 %v382
        %v415 = vcvt.s32.f32 %v383
        %v416 = vcvt.s32.f32 %v384
        %v417 = vcvt.s32.f32 %v385
        %v418 = vcvt.s32.f32 %v386
        %v419 = vcvt.s32.f32 %v387
        %v420 = vcvt.s32.f32 %v388
        %v421 = vcvt.s32.f32 %v389
        %v422 = vcvt.s32.f32 %v390
        %v423 = vcvt.s32.f32 %v391
        %v424 = vcvt.s32.f32 %v392
        %v425 = vcvt.s32.f32 %v393
        %v426 = vcvt.s32.f32 %v394
        %v427 = vcvt.s32.f32 %v395
        %v428 = vcvt.s32.f32 %v396
        %v429 = vcvt.s32.f32 %v397
        %v430 = vcvt.s32.f32 %v398
        %v431 = vcvt.s32.f32 %v399
        %v432 = vcvt.s32.f32 %v400
        %v433 = vcvt.s32.f32 %v401
        %v434 = vcvt.s32.f32 %v402
        %v435 = vcvt.s32.f32 %v403
        %v436 = vcvt.s32.f32 %v404
        %v437 = vcvt.s32.f32 %v405
        %v438 = vpack.c.bf16 %v408, %v406
        %v439 = vpack.c.bf16 %v409, %v407
        %v440 = vpack.c.bf16 %v412, %v410
        %v441 = vpack.c.bf16 %v413, %v411
        %v442 = vpack.c.bf16 %v416, %v414
        %v443 = vpack.c.bf16 %v417, %v415
        %v444 = vpack.c.bf16 %v420, %v418
        %v445 = vpack.c.bf16 %v421, %v419
        %v446 = vpack.c.bf16 %v424, %v422
        %v447 = vpack.c.bf16 %v425, %v423
        %v448 = vpack.c.bf16 %v428, %v426
        %v449 = vpack.c.bf16 %v429, %v427
        %v450 = vpack.c.bf16 %v432, %v430
        %v451 = vpack.c.bf16 %v433, %v431
        %v452 = vpack.c.bf16 %v436, %v434
        %v453 = vpack.c.bf16 %v437, %v435
        %v454 = vld [vmem:[%s291] sm:$0xf]
        %v455 = vld [vmem:[%s291 + $0x4] sm:$0xf]
        %v456 = vld [vmem:[%s291 + $0x8] sm:$0xf]
        %v457 = vld [vmem:[%s291 + $0xc] sm:$0xf]
        %v458 = vld [vmem:[%s291 + $0x10] sm:$0xf]
        %v459 = vld [vmem:[%s291 + $0x14] sm:$0xf]
        %v460 = vld [vmem:[%s291 + $0x18] sm:$0xf]
        %v461 = vld [vmem:[%s291 + $0x1c] sm:$0xf]
        %v462 = vld [vmem:[%s291 + $0x20] sm:$0xf]
        %v463 = vld [vmem:[%s291 + $0x24] sm:$0xf]
        %v464 = vld [vmem:[%s291 + $0x28] sm:$0xf]
        %v465 = vld [vmem:[%s291 + $0x2c] sm:$0xf]
        %v466 = vld [vmem:[%s291 + $0x30] sm:$0xf]
        %v467 = vld [vmem:[%s291 + $0x34] sm:$0xf]
        %v468 = vld [vmem:[%s291 + $0x38] sm:$0xf]
        %v469 = vld [vmem:[%s291 + $0x3c] sm:$0xf]
        %v470 = vld [vmem:[%s291 + $0x40] sm:$0xf]
        %v471 = vld [vmem:[%s291 + $0x44] sm:$0xf]
        %v472 = vld [vmem:[%s291 + $0x48] sm:$0xf]
        %v473 = vld [vmem:[%s291 + $0x4c] sm:$0xf]
        %v474 = vld [vmem:[%s291 + $0x50] sm:$0xf]
        %v475 = vld [vmem:[%s291 + $0x54] sm:$0xf]
        %v476 = vld [vmem:[%s291 + $0x58] sm:$0xf]
        %v477 = vld [vmem:[%s291 + $0x5c] sm:$0xf]
        %v478 = vld [vmem:[%s291 + $0x60] sm:$0xf]
        %v479 = vld [vmem:[%s291 + $0x64] sm:$0xf]
        %v480 = vld [vmem:[%s291 + $0x68] sm:$0xf]
        %v481 = vld [vmem:[%s291 + $0x6c] sm:$0xf]
        %v482 = vld [vmem:[%s291 + $0x70] sm:$0xf]
        %v483 = vld [vmem:[%s291 + $0x74] sm:$0xf]
        %v484 = vld [vmem:[%s291 + $0x78] sm:$0xf]
        %v485 = vld [vmem:[%s291 + $0x7c] sm:$0xf]
        %v518 = vunpack.c.l.b16 %v454
        %v519 = vunpack.c.l.b16 %v455
        %v520 = vunpack.c.l.b16 %v456
        %v521 = vunpack.c.l.b16 %v457
        %v522 = vunpack.c.l.b16 %v458
        %v523 = vunpack.c.l.b16 %v459
        %v524 = vunpack.c.l.b16 %v460
        %v525 = vunpack.c.l.b16 %v461
        %v526 = vunpack.c.l.b16 %v462
        %v527 = vunpack.c.l.b16 %v463
        %v528 = vunpack.c.l.b16 %v464
        %v529 = vunpack.c.l.b16 %v465
        %v530 = vunpack.c.l.b16 %v466
        %v531 = vunpack.c.l.b16 %v467
        %v532 = vunpack.c.l.b16 %v468
        %v533 = vunpack.c.l.b16 %v469
        %v534 = vunpack.c.l.b16 %v470
        %v535 = vunpack.c.l.b16 %v471
        %v536 = vunpack.c.l.b16 %v472
        %v537 = vunpack.c.l.b16 %v473
        %v538 = vunpack.c.l.b16 %v474
        %v539 = vunpack.c.l.b16 %v475
        %v540 = vunpack.c.l.b16 %v476
        %v541 = vunpack.c.l.b16 %v477
        %v542 = vunpack.c.l.b16 %v478
        %v543 = vunpack.c.l.b16 %v479
        %v544 = vunpack.c.l.b16 %v480
        %v545 = vunpack.c.l.b16 %v481
        %v546 = vunpack.c.l.b16 %v482
        %v547 = vunpack.c.l.b16 %v483
        %v548 = vunpack.c.l.b16 %v484
        %v549 = vunpack.c.l.b16 %v485
        %v550 = vpack.c.b16 %v519, %v518
        %v551 = vpack.c.b16 %v521, %v520
        %v552 = vpack.c.b16 %v523, %v522
        %v553 = vpack.c.b16 %v525, %v524
        %v554 = vpack.c.b16 %v527, %v526
        %v555 = vpack.c.b16 %v529, %v528
        %v556 = vpack.c.b16 %v531, %v530
        %v557 = vpack.c.b16 %v533, %v532
        %v558 = vpack.c.b16 %v535, %v534
        %v559 = vpack.c.b16 %v537, %v536
        %v560 = vpack.c.b16 %v539, %v538
        %v561 = vpack.c.b16 %v541, %v540
        %v562 = vpack.c.b16 %v543, %v542
        %v563 = vpack.c.b16 %v545, %v544
        %v564 = vpack.c.b16 %v547, %v546
        %v565 = vpack.c.b16 %v549, %v548
        %582 = vmatpush.bf16.msra.mxu0 %v557
        %583 = vmatpush.bf16.msra.mxu0 %v556
        %584 = vmatpush.bf16.msra.mxu0 %v555
        %585 = vmatpush.bf16.msra.mxu0 %v554
        %586 = vmatpush.bf16.msra.mxu0 %v553
        %587 = vmatpush.bf16.msra.mxu0 %v552
        %588 = vmatpush.bf16.msra.mxu0 %v551
        %589 = vmatpush.bf16.msra.mxu0 %v550
        %590 = vmatmul.bf16.gmra.mxu0 %v438
        %v591 = vpop.f32.mrf.mxu0
        %v592 = vadd.f32 0.0, %v591
        %v593 = vpop.f32.mrf.mxu0
        %v594 = vadd.f32 0.0, %v593
        %595 = vmatmul.bf16.gmra.mxu0 %v440
        %v596 = vpop.f32.mrf.mxu0
        %v597 = vadd.f32 0.0, %v596
        %v598 = vpop.f32.mrf.mxu0
        %v599 = vadd.f32 0.0, %v598
        %600 = vmatmul.bf16.gmra.mxu0 %v442
        %v601 = vpop.f32.mrf.mxu0
        %v602 = vadd.f32 0.0, %v601
        %v603 = vpop.f32.mrf.mxu0
        %v604 = vadd.f32 0.0, %v603
        %605 = vmatmul.bf16.gmra.mxu0 %v444
        %v606 = vpop.f32.mrf.mxu0
        %v607 = vadd.f32 0.0, %v606
        %v608 = vpop.f32.mrf.mxu0
        %v609 = vadd.f32 0.0, %v608
        %610 = vmatmul.bf16.gmra.mxu0 %v446
        %v611 = vpop.f32.mrf.mxu0
        %v612 = vadd.f32 0.0, %v611
        %v613 = vpop.f32.mrf.mxu0
        %v614 = vadd.f32 0.0, %v613
        %615 = vmatmul.bf16.gmra.mxu0 %v448
        %v616 = vpop.f32.mrf.mxu0
        %v617 = vadd.f32 0.0, %v616
        %v618 = vpop.f32.mrf.mxu0
        %v619 = vadd.f32 0.0, %v618
        %620 = vmatmul.bf16.gmra.mxu0 %v450
        %v621 = vpop.f32.mrf.mxu0
        %v622 = vadd.f32 0.0, %v621
        %v623 = vpop.f32.mrf.mxu0
        %v624 = vadd.f32 0.0, %v623
        %625 = vmatmul.bf16.gmra.mxu0 %v452
        %v626 = vpop.f32.mrf.mxu0
        %v627 = vadd.f32 0.0, %v626
        %v628 = vpop.f32.mrf.mxu0
        %v629 = vadd.f32 0.0, %v628
        %630 = vdwg.mxu0
        %631 = vmatpush.bf16.msra.mxu0 %v565
        %632 = vmatpush.bf16.msra.mxu0 %v564
        %633 = vmatpush.bf16.msra.mxu0 %v563
        %634 = vmatpush.bf16.msra.mxu0 %v562
        %635 = vmatpush.bf16.msra.mxu0 %v561
        %636 = vmatpush.bf16.msra.mxu0 %v560
        %637 = vmatpush.bf16.msra.mxu0 %v559
        %638 = vmatpush.bf16.msra.mxu0 %v558
        %639 = vmatmul.bf16.gmra.mxu0 %v439
        %v640 = vpop.f32.mrf.mxu0
        %v641 = vadd.f32 %v592, %v640
        %v642 = vpop.f32.mrf.mxu0
        %v643 = vadd.f32 %v594, %v642
        %644 = vmatmul.bf16.gmra.mxu0 %v441
        %v645 = vpop.f32.mrf.mxu0
        %v646 = vadd.f32 %v597, %v645
        %v647 = vpop.f32.mrf.mxu0
        %v648 = vadd.f32 %v599, %v647
        %649 = vmatmul.bf16.gmra.mxu0 %v443
        %v650 = vpop.f32.mrf.mxu0
        %v651 = vadd.f32 %v602, %v650
        %v652 = vpop.f32.mrf.mxu0
        %v653 = vadd.f32 %v604, %v652
        %654 = vmatmul.bf16.gmra.mxu0 %v445
        %v655 = vpop.f32.mrf.mxu0
        %v656 = vadd.f32 %v607, %v655
        %v657 = vpop.f32.mrf.mxu0
        %v658 = vadd.f32 %v609, %v657
        %659 = vmatmul.bf16.gmra.mxu0 %v447
        %v660 = vpop.f32.mrf.mxu0
        %v661 = vadd.f32 %v612, %v660
        %v662 = vpop.f32.mrf.mxu0
        %v663 = vadd.f32 %v614, %v662
        %664 = vmatmul.bf16.gmra.mxu0 %v449
        %v665 = vpop.f32.mrf.mxu0
        %v666 = vadd.f32 %v617, %v665
        %v667 = vpop.f32.mrf.mxu0
        %v668 = vadd.f32 %v619, %v667
        %669 = vmatmul.bf16.gmra.mxu0 %v451
        %v670 = vpop.f32.mrf.mxu0
        %v671 = vadd.f32 %v622, %v670
        %v672 = vpop.f32.mrf.mxu0
        %v673 = vadd.f32 %v624, %v672
        %674 = vmatmul.bf16.gmra.mxu0 %v453
        %v675 = vpop.f32.mrf.mxu0
        %v676 = vadd.f32 %v627, %v675
        %v677 = vpop.f32.mrf.mxu0
        %v678 = vadd.f32 %v629, %v677
        %679 = vdwg.mxu0
        %v680 = vld [vmem:[%s329] sm:$0xff]
        %v681 = vld [vmem:[%s329 + $0x8] sm:$0xff]
        %v682 = vld [vmem:[%s329 + $0x10] sm:$0xff]
        %v683 = vld [vmem:[%s329 + $0x18] sm:$0xff]
        %v684 = vld [vmem:[%s329 + $0x20] sm:$0xff]
        %v685 = vld [vmem:[%s329 + $0x28] sm:$0xff]
        %v686 = vld [vmem:[%s329 + $0x30] sm:$0xff]
        %v687 = vld [vmem:[%s329 + $0x38] sm:$0xff]
        %v688 = vld [vmem:[%s329 + $0x40] sm:$0xff]
        %v689 = vld [vmem:[%s329 + $0x48] sm:$0xff]
        %v690 = vld [vmem:[%s329 + $0x50] sm:$0xff]
        %v691 = vld [vmem:[%s329 + $0x58] sm:$0xff]
        %v692 = vld [vmem:[%s329 + $0x60] sm:$0xff]
        %v693 = vld [vmem:[%s329 + $0x68] sm:$0xff]
        %v694 = vld [vmem:[%s329 + $0x70] sm:$0xff]
        %v695 = vld [vmem:[%s329 + $0x78] sm:$0xff]
        %v696 = vld [vmem:[%s341] sm:$0xff]
        %v697 = vld [vmem:[%s341 + $0x8] sm:$0xff]
        %v698 = vld [vmem:[%s341 + $0x10] sm:$0xff]
        %v699 = vld [vmem:[%s341 + $0x18] sm:$0xff]
        %v700 = vld [vmem:[%s341 + $0x20] sm:$0xff]
        %v701 = vld [vmem:[%s341 + $0x28] sm:$0xff]
        %v702 = vld [vmem:[%s341 + $0x30] sm:$0xff]
        %v703 = vld [vmem:[%s341 + $0x38] sm:$0xff]
        %v704 = vld [vmem:[%s341 + $0x40] sm:$0xff]
        %v705 = vld [vmem:[%s341 + $0x48] sm:$0xff]
        %v706 = vld [vmem:[%s341 + $0x50] sm:$0xff]
        %v707 = vld [vmem:[%s341 + $0x58] sm:$0xff]
        %v708 = vld [vmem:[%s341 + $0x60] sm:$0xff]
        %v709 = vld [vmem:[%s341 + $0x68] sm:$0xff]
        %v710 = vld [vmem:[%s341 + $0x70] sm:$0xff]
        %v711 = vld [vmem:[%s341 + $0x78] sm:$0xff]
        %713 = vset.pattern.permute.xlu0 0
        %714 = vperm.xlu0 %713, %v696
        %v715 = vpop.permute.xlu0 %714
        %718 = vset.pattern.permute.xlu0 0
        %719 = vperm.xlu0 %718, %v697
        %v720 = vpop.permute.xlu0 %719
        %723 = vset.pattern.permute.xlu0 0
        %724 = vperm.xlu0 %723, %v698
        %v725 = vpop.permute.xlu0 %724
        %728 = vset.pattern.permute.xlu0 0
        %729 = vperm.xlu0 %728, %v699
        %v730 = vpop.permute.xlu0 %729
        %733 = vset.pattern.permute.xlu0 0
        %734 = vperm.xlu0 %733, %v700
        %v735 = vpop.permute.xlu0 %734
        %738 = vset.pattern.permute.xlu0 0
        %739 = vperm.xlu0 %738, %v701
        %v740 = vpop.permute.xlu0 %739
        %743 = vset.pattern.permute.xlu0 0
        %744 = vperm.xlu0 %743, %v702
        %v745 = vpop.permute.xlu0 %744
        %748 = vset.pattern.permute.xlu0 0
        %749 = vperm.xlu0 %748, %v703
        %v750 = vpop.permute.xlu0 %749
        %753 = vset.pattern.permute.xlu0 0
        %754 = vperm.xlu0 %753, %v704
        %v755 = vpop.permute.xlu0 %754
        %758 = vset.pattern.permute.xlu0 0
        %759 = vperm.xlu0 %758, %v705
        %v760 = vpop.permute.xlu0 %759
        %763 = vset.pattern.permute.xlu0 0
        %764 = vperm.xlu0 %763, %v706
        %v765 = vpop.permute.xlu0 %764
        %768 = vset.pattern.permute.xlu0 0
        %769 = vperm.xlu0 %768, %v707
        %v770 = vpop.permute.xlu0 %769
        %773 = vset.pattern.permute.xlu0 0
        %774 = vperm.xlu0 %773, %v708
        %v775 = vpop.permute.xlu0 %774
        %778 = vset.pattern.permute.xlu0 0
        %779 = vperm.xlu0 %778, %v709
        %v780 = vpop.permute.xlu0 %779
        %783 = vset.pattern.permute.xlu0 0
        %784 = vperm.xlu0 %783, %v710
        %v785 = vpop.permute.xlu0 %784
        %788 = vset.pattern.permute.xlu0 0
        %789 = vperm.xlu0 %788, %v711
        %v790 = vpop.permute.xlu0 %789
        %v792 = vmul.f32 %v715, %v641
        %v793 = vmul.f32 %v720, %v643
        %v794 = vmul.f32 %v725, %v646
        %v795 = vmul.f32 %v730, %v648
        %v796 = vmul.f32 %v735, %v651
        %v797 = vmul.f32 %v740, %v653
        %v798 = vmul.f32 %v745, %v656
        %v799 = vmul.f32 %v750, %v658
        %v800 = vmul.f32 %v755, %v661
        %v801 = vmul.f32 %v760, %v663
        %v802 = vmul.f32 %v765, %v666
        %v803 = vmul.f32 %v770, %v668
        %v804 = vmul.f32 %v775, %v671
        %v805 = vmul.f32 %v780, %v673
        %v806 = vmul.f32 %v785, %v676
        %v807 = vmul.f32 %v790, %v678
        %v808 = vadd.f32 %v680, %v792
        %v809 = vadd.f32 %v681, %v793
        %v810 = vadd.f32 %v682, %v794
        %v811 = vadd.f32 %v683, %v795
        %v812 = vadd.f32 %v684, %v796
        %v813 = vadd.f32 %v685, %v797
        %v814 = vadd.f32 %v686, %v798
        %v815 = vadd.f32 %v687, %v799
        %v816 = vadd.f32 %v688, %v800
        %v817 = vadd.f32 %v689, %v801
        %v818 = vadd.f32 %v690, %v802
        %v819 = vadd.f32 %v691, %v803
        %v820 = vadd.f32 %v692, %v804
        %v821 = vadd.f32 %v693, %v805
        %v822 = vadd.f32 %v694, %v806
        %v823 = vadd.f32 %v695, %v807
        %824 = vst [vmem:[%s329] sm:$0xff] %v808
        %825 = vst [vmem:[%s329 + $0x8] sm:$0xff] %v809
        %826 = vst [vmem:[%s329 + $0x10] sm:$0xff] %v810
        %827 = vst [vmem:[%s329 + $0x18] sm:$0xff] %v811
        %828 = vst [vmem:[%s329 + $0x20] sm:$0xff] %v812
        %829 = vst [vmem:[%s329 + $0x28] sm:$0xff] %v813
        %830 = vst [vmem:[%s329 + $0x30] sm:$0xff] %v814
        %831 = vst [vmem:[%s329 + $0x38] sm:$0xff] %v815
        %832 = vst [vmem:[%s329 + $0x40] sm:$0xff] %v816
        %833 = vst [vmem:[%s329 + $0x48] sm:$0xff] %v817
        %834 = vst [vmem:[%s329 + $0x50] sm:$0xff] %v818
        %835 = vst [vmem:[%s329 + $0x58] sm:$0xff] %v819
        %836 = vst [vmem:[%s329 + $0x60] sm:$0xff] %v820
        %837 = vst [vmem:[%s329 + $0x68] sm:$0xff] %v821
        %838 = vst [vmem:[%s329 + $0x70] sm:$0xff] %v822
        %839 = vst [vmem:[%s329 + $0x78] sm:$0xff] %v823
        %p840 = scmp.eq.s32.totalorder %s27, 2
        %p841 = scmp.eq.s32.totalorder %s28, 1
        %p842 = pnand %p840, %p841
        %p843 = pneg %p842
        // Predicated region
        $region68: #{tpu_custom_call.1} parent=54 // pred_check
          _
        $region69: #{tpu_custom_call.1} parent=54 // pred_check_branch
          %845 = sbr.rel (%p842) target = $region71
        $region70: #{tpu_custom_call.1} parent=54 // pred_region
          %v846 = vld [vmem:[%s329] sm:$0xff]
          %v847 = vld [vmem:[%s329 + $0x8] sm:$0xff]
          %v848 = vld [vmem:[%s329 + $0x10] sm:$0xff]
          %v849 = vld [vmem:[%s329 + $0x18] sm:$0xff]
          %v850 = vld [vmem:[%s329 + $0x20] sm:$0xff]
          %v851 = vld [vmem:[%s329 + $0x28] sm:$0xff]
          %v852 = vld [vmem:[%s329 + $0x30] sm:$0xff]
          %v853 = vld [vmem:[%s329 + $0x38] sm:$0xff]
          %v854 = vld [vmem:[%s329 + $0x40] sm:$0xff]
          %v855 = vld [vmem:[%s329 + $0x48] sm:$0xff]
          %v856 = vld [vmem:[%s329 + $0x50] sm:$0xff]
          %v857 = vld [vmem:[%s329 + $0x58] sm:$0xff]
          %v858 = vld [vmem:[%s329 + $0x60] sm:$0xff]
          %v859 = vld [vmem:[%s329 + $0x68] sm:$0xff]
          %v860 = vld [vmem:[%s329 + $0x70] sm:$0xff]
          %v861 = vld [vmem:[%s329 + $0x78] sm:$0xff]
          %v862 = vld [vmem:[%s3] sm:$0x1]
          %v864 = vperm.slane %v862, 0
          %v866 = vadd.f32 %v846, %v864
          %v867 = vadd.f32 %v847, %v864
          %v868 = vadd.f32 %v848, %v864
          %v869 = vadd.f32 %v849, %v864
          %v870 = vadd.f32 %v850, %v864
          %v871 = vadd.f32 %v851, %v864
          %v872 = vadd.f32 %v852, %v864
          %v873 = vadd.f32 %v853, %v864
          %v874 = vadd.f32 %v854, %v864
          %v875 = vadd.f32 %v855, %v864
          %v876 = vadd.f32 %v856, %v864
          %v877 = vadd.f32 %v857, %v864
          %v878 = vadd.f32 %v858, %v864
          %v879 = vadd.f32 %v859, %v864
          %v880 = vadd.f32 %v860, %v864
          %v881 = vadd.f32 %v861, %v864
          %882 = vst [vmem:[%s329] sm:$0xff] %v866
          %883 = vst [vmem:[%s329 + $0x8] sm:$0xff] %v867
          %884 = vst [vmem:[%s329 + $0x10] sm:$0xff] %v868
          %885 = vst [vmem:[%s329 + $0x18] sm:$0xff] %v869
          %886 = vst [vmem:[%s329 + $0x20] sm:$0xff] %v870
          %887 = vst [vmem:[%s329 + $0x28] sm:$0xff] %v871
          %888 = vst [vmem:[%s329 + $0x30] sm:$0xff] %v872
          %889 = vst [vmem:[%s329 + $0x38] sm:$0xff] %v873
          %890 = vst [vmem:[%s329 + $0x40] sm:$0xff] %v874
          %891 = vst [vmem:[%s329 + $0x48] sm:$0xff] %v875
          %892 = vst [vmem:[%s329 + $0x50] sm:$0xff] %v876
          %893 = vst [vmem:[%s329 + $0x58] sm:$0xff] %v877
          %894 = vst [vmem:[%s329 + $0x60] sm:$0xff] %v878
          %895 = vst [vmem:[%s329 + $0x68] sm:$0xff] %v879
          %896 = vst [vmem:[%s329 + $0x70] sm:$0xff] %v880
          %897 = vst [vmem:[%s329 + $0x78] sm:$0xff] %v881
        $region71: #{tpu_custom_call.1} parent=54 // pred_fallthru
          _
        %s898 = sand.u32 %s155, 1
        %s899 = scalar_lea.sflag [#allocation5], %s898
        %s900 = sand.u32 %s155, 1
        %s901 = smul.addr %s900, 128
        %s902 = scalar_lea.vmem [#allocation6], %s901
        // Predicated region
        $region72: #{tpu_custom_call.1} parent=54 // pred_check
          %p903 = pneg %p165
        $region73: #{tpu_custom_call.1} parent=54 // pred_check_branch
          %905 = sbr.rel (%p903) target = $region75
        $region74: #{tpu_custom_call.1} parent=54 // pred_region
          %s906 = smul.u32 16, %s26
          %908 = vsyncadd %s899, 0
          %s909 = smul.addr %s906, 8
          %s910 = scalar_lea.hbm %s4, %s909
          %s911 = sshll.u32 %s902, 4
          %s912 = int_to_ptr.vmem [resolvable:$true] %s911
          %s913 = sshll.u32 %s910, 4
          %s914 = int_to_ptr.hbm [resolvable:$true] %s913
          %919 = dma.vmem_to_hbm [thread:$0]  %s912, 2048, %s914, %s899, 128, 128, 8
        $region75: #{tpu_custom_call.1} parent=54 // pred_fallthru
          _
      $region55: #{tpu_custom_call.1} parent=5 // pred_fallthru
        _
      %p920 = scmp.le.s32.totalorder 2, %s16
      // Predicated region
      $region76: #{tpu_custom_call.1} parent=5 // pred_check
        %p921 = pneg %p920
      $region77: #{tpu_custom_call.1} parent=5 // pred_check_branch
        %923 = sbr.rel (%p921) target = $region79
      $region78: #{tpu_custom_call.1} parent=5 // pred_region
        %s924 = ssub.s32 %s16, 2
        // Predicated region
        $region80: #{tpu_custom_call.1} parent=78 // pred_check
          %p925 = pneg %p171
        $region81: #{tpu_custom_call.1} parent=78 // pred_check_branch
          %927 = sbr.rel (%p925) target = $region83
        $region82: #{tpu_custom_call.1} parent=78 // pred_region
          %s928 = sand.u32 %s156, 1
          %s929 = scalar_lea.sflag [#allocation5], %s928
          %s930 = sand.u32 %s156, 1
          %s931 = smul.addr %s930, 128
          %s932 = scalar_lea.vmem [#allocation6], %s931
          %934 = dma.done %s929, 2048
        $region83: #{tpu_custom_call.1} parent=78 // pred_fallthru
          _
      $region79: #{tpu_custom_call.1} parent=5 // pred_fallthru
        _
    $region6: #{tpu_custom_call.1} parent=1 // loop_footer
      %s20 = sadd.s32 1, %s16
    $region7: #{tpu_custom_call.1} parent=1 // loop_footer_branch
      %15 = sbr.rel target = $region3
    $region8: #{tpu_custom_call.1} parent=1 // loop_exit
      _
    %935 = vsyncpa [#allocation4], 1
    %s936 = scalar_lea.sflag [#allocation4], 1
    %937 = vsyncpa %s936, 1
    %938 = vsyncpa [#allocation5], 1
    %s939 = scalar_lea.sflag [#allocation5], 1
    %940 = vsyncpa %s939, 1

</llo_original>
